<compile_context>
chip_gen: v6e
topology: v6e:2x2x1
jax: 0.10.0
libtpu: 0.0.40
codegen_flags: <defaults>
</compile_context>

<pallas_src>
import functools

import jax
import jax.numpy as jnp
from jax.experimental import pallas as pl
from jax.experimental.pallas import tpu as pltpu


def _round_up(x, m):
    return (x + m - 1) // m * m


def hebbian_mlp_kernel(x_ref, w1t_ref, w2t_ref, out_ref, *, num_outputs):
    """Fused lin1 -> sigmoid -> lin2 -> softmax for one batch tile.

    x_ref   : (TILE_B, num_inputs)       input rows
    w1t_ref : (num_inputs, num_hidden)   lin1.weight pre-transposed (resident)
    w2t_ref : (num_hidden, OUT_PAD)      lin2.weight pre-transposed, lane-padded (resident)
    out_ref : (TILE_B, OUT_PAD)          lane-dense softmax output
    """
    # Hidden layer: lane-dense MXU feed, f32 accumulation.
    h = jnp.dot(x_ref[...], w1t_ref[...], preferred_element_type=jnp.float32)
    # sigmoid(x) = 0.5*(tanh(x/2)+1): one EUP transcendental, no exp overflow
    # for large-magnitude pre-activations.
    h = 0.5 * (jnp.tanh(0.5 * h) + 1.0)

    # Output layer (K = num_hidden lane-dense on the MXU).
    logits = jnp.dot(h, w2t_ref[...], preferred_element_type=jnp.float32)

    # Mask padded output lanes to -inf so they contribute exp(-inf) = 0.
    lane = jax.lax.broadcasted_iota(jnp.int32, logits.shape, dimension=1)
    logits = jnp.where(lane < num_outputs, logits, -jnp.inf)

    # Row-wise softmax; the divide goes to the EUP (approx reciprocal) rather
    # than a multi-cycle VALU vdiv.
    m = jnp.max(logits, axis=1, keepdims=True)
    e = jnp.exp(logits - m)
    denom = jnp.sum(e, axis=1, keepdims=True)
    out_ref[...] = (e * pl.reciprocal(denom, approx=True)).astype(out_ref.dtype)


def hebbian_mlp_forward(x, w1, w2, *, max_tile_b=1024):
    """Forward pass of HebbianMultiLayerPerceptron (output identical for any y).

    x : (..., num_inputs)  — flattened to (-1, num_inputs), like X.reshape(...)
    w1: (num_hidden, num_inputs)   torch nn.Linear layout (lin1.weight)
    w2: (num_outputs, num_hidden)  torch nn.Linear layout (lin2.weight)
    Returns float32 softmax probabilities of shape (batch, num_outputs).
    """
    num_hidden, num_inputs = w1.shape
    num_outputs, nh = w2.shape
    assert nh == num_hidden

    # Match the module: X.reshape(-1, num_inputs).
    x = jnp.asarray(x, jnp.float32).reshape(-1, num_inputs)
    batch = x.shape[0]

    # Pre-transpose weights once in XLA (static across calls) so both matmuls
    # are lane-dense MXU feeds; pad output features to a full 128-lane width so
    # kernel stores and the softmax reduce are unmasked / lane-dense.
    out_pad = _round_up(num_outputs, 128)
    w1_t = jnp.asarray(w1, jnp.float32).T                        # (num_inputs, num_hidden)
    w2_t = jnp.pad(jnp.asarray(w2, jnp.float32),
                   ((0, out_pad - num_outputs), (0, 0))).T       # (num_hidden, out_pad)

    # Batch grid: large tiles amortize the ~0.35us/grid-step overhead; pad the
    # batch so it divides evenly (padded rows are computed then discarded).
    tile_b = min(max_tile_b, _round_up(batch, 8))
    padded_batch = _round_up(batch, tile_b)
    if padded_batch != batch:
        x = jnp.pad(x, ((0, padded_batch - batch), (0, 0)))
    grid = (padded_batch // tile_b,)

    flops = 2 * padded_batch * (num_inputs * num_hidden + num_hidden * out_pad)
    transcendentals = padded_batch * (num_hidden + out_pad + 1)  # tanh + exp + recip
    bytes_accessed = (x.size * x.dtype.itemsize
                      + w1_t.size * w1_t.dtype.itemsize
                      + w2_t.size * w2_t.dtype.itemsize
                      + padded_batch * out_pad * 4)

    kernel = functools.partial(hebbian_mlp_kernel, num_outputs=num_outputs)

    out_padded = pl.pallas_call(
        kernel,
        out_shape=jax.ShapeDtypeStruct((padded_batch, out_pad), jnp.float32),
        grid=grid,
        in_specs=[
            pl.BlockSpec((tile_b, num_inputs), lambda i: (i, 0)),      # x tile
            pl.BlockSpec((num_inputs, num_hidden), lambda i: (0, 0)),  # w1_t (resident)
            pl.BlockSpec((num_hidden, out_pad), lambda i: (0, 0)),     # w2_t (resident)
        ],
        out_specs=pl.BlockSpec((tile_b, out_pad), lambda i: (i, 0)),
        compiler_params=pltpu.CompilerParams(
            dimension_semantics=("parallel",)),   # shard batch tiles across TCs (v7x)
        cost_estimate=pl.CostEstimate(
            flops=flops,
            transcendentals=transcendentals,
            bytes_accessed=bytes_accessed),
    )(x, w1_t, w2_t)

    return out_padded[:batch, :num_outputs]


def _torch_linear_init(key, out_features, in_features):
    """Deterministic init mimicking nn.Linear default: U(-1/sqrt(fan_in), +1/sqrt(fan_in))."""
    bound = 1.0 / jnp.sqrt(jnp.float32(in_features))
    return jax.random.uniform(
        key, (out_features, in_features), dtype=jnp.float32, minval=-bound, maxval=bound
    )


def _reference_forward(x, w1, w2):
    h = jax.nn.sigmoid(x.reshape(-1, w1.shape[1]) @ w1.T)
    return jax.nn.softmax(h @ w2.T, axis=1)


if __name__ == "__main__":
    # Shapes implied by the module: num_inputs = 2*2 = 4 (agent + target obs),
    # num_hidden = 128 (default), num_outputs = 4 (GridWorld actions).
    num_inputs, num_hidden, num_outputs = 4, 128, 4

    key = jax.random.PRNGKey(0)
    k1, k2, kx_small, kx_big = jax.random.split(key, 4)
    w1 = _torch_linear_init(k1, num_hidden, num_inputs)   # lin1.weight
    w2 = _torch_linear_init(k2, num_outputs, num_hidden)  # lin2.weight
    # bias=False by default in MultiLayerPerceptron, so no bias terms.

    cases = (
        ("small", kx_small, 16),          # single tile
        ("multi_tile", kx_big, 1024 + 7), # multiple tiles + batch-padding path
    )
    for name, kx, batch in cases:
        x = jax.random.normal(kx, (batch, num_inputs), dtype=jnp.float32)
        y_pred = jax.block_until_ready(hebbian_mlp_forward(x, w1, w2))
        y_ref = _reference_forward(x, w1, w2)
        assert y_pred.shape == (batch, num_outputs), name
        # approx=True reciprocal on the EUP: tolerance loosened accordingly.
        assert jnp.allclose(y_pred, y_ref, atol=2e-3, rtol=2e-3), name
        assert jnp.allclose(jnp.sum(y_pred, axis=1), 1.0, atol=5e-3), name

    print("KERNEL_OK")
</pallas_src>

<mosaic_0001>
module attributes {stable_mosaic.version = 11 : i64} {
  func.func @hebbian_mlp_kernel(%arg0: i32, %arg1: memref<16x4xf32, #tpu.memory_space<vmem>>, %arg2: memref<4x128xf32, #tpu.memory_space<vmem>>, %arg3: memref<128x128xf32, #tpu.memory_space<vmem>>, %arg4: memref<16x128xf32, #tpu.memory_space<vmem>>) attributes {dimension_semantics = [#tpu.dimension_semantics<parallel>], iteration_bounds = array<i64: 1>, scalar_prefetch = 0 : i64, scratch_operands = 0 : i64, tpu.core_type = #tpu.core_type<tc>, window_params = [{transform_indices = @transform_0, window_bounds = array<i64: 16, 4>}, {pipeline_mode = #tpu.pipeline_mode<synchronous>, transform_indices = @transform_1, window_bounds = array<i64: 4, 128>}, {pipeline_mode = #tpu.pipeline_mode<synchronous>, transform_indices = @transform_2, window_bounds = array<i64: 128, 128>}, {transform_indices = @transform_3, window_bounds = array<i64: 16, 128>}]} {
    %c0 = arith.constant 0 : index
    %c0_0 = arith.constant 0 : index
    %0 = vector.load %arg1[%c0, %c0_0] : memref<16x4xf32, #tpu.memory_space<vmem>>, vector<16x4xf32>
    %c0_1 = arith.constant 0 : index
    %c0_2 = arith.constant 0 : index
    %1 = vector.load %arg2[%c0_1, %c0_2] : memref<4x128xf32, #tpu.memory_space<vmem>>, vector<4x128xf32>
    %cst = arith.constant dense<0.000000e+00> : vector<16x128xf32>
    %2 = tpu.matmul %0, %1, %cst {dimension_numbers = #tpu.dot_dimension_numbers<[1], [0], [0], [1], [0, 0, 1, 1], [], []>} : vector<16x4xf32>, vector<4x128xf32>, vector<16x128xf32> -> vector<16x128xf32>
    %cst_3 = arith.constant 5.000000e-01 : f32
    %3 = vector.broadcast %cst_3 : f32 to vector<16x128xf32>
    %4 = arith.mulf %3, %2 : vector<16x128xf32>
    %5 = math.tanh %4 : vector<16x128xf32>
    %cst_4 = arith.constant 1.000000e+00 : f32
    %6 = vector.broadcast %cst_4 : f32 to vector<16x128xf32>
    %7 = arith.addf %5, %6 : vector<16x128xf32>
    %cst_5 = arith.constant 5.000000e-01 : f32
    %8 = vector.broadcast %cst_5 : f32 to vector<16x128xf32>
    %9 = arith.mulf %8, %7 : vector<16x128xf32>
    %c0_6 = arith.constant 0 : index
    %c0_7 = arith.constant 0 : index
    %10 = vector.load %arg3[%c0_6, %c0_7] : memref<128x128xf32, #tpu.memory_space<vmem>>, vector<128x128xf32>
    %cst_8 = arith.constant dense<0.000000e+00> : vector<16x128xf32>
    %11 = tpu.matmul %9, %10, %cst_8 {dimension_numbers = #tpu.dot_dimension_numbers<[1], [0], [0], [1], [0, 0, 1, 1], [], []>} : vector<16x128xf32>, vector<128x128xf32>, vector<16x128xf32> -> vector<16x128xf32>
    %12 = tpu.iota {dimensions = array<i32: 1>} : vector<16x128xi32>
    %c4_i32 = arith.constant 4 : i32
    %13 = vector.broadcast %c4_i32 : i32 to vector<16x128xi32>
    %14 = arith.cmpi slt, %12, %13 : vector<16x128xi32>
    %cst_9 = arith.constant 0xFF800000 : f32
    %15 = vector.broadcast %cst_9 : f32 to vector<16x128xf32>
    %16 = arith.select %14, %11, %15 : vector<16x128xi1>, vector<16x128xf32>
    %cst_10 = arith.constant dense<0xFF800000> : vector<16xf32>
    %17 = vector.multi_reduction <maximumf>, %16, %cst_10 [1] : vector<16x128xf32> to vector<16xf32>
    %18 = vector.shape_cast %17 : vector<16xf32> to vector<16x1xf32>
    %19 = vector.broadcast %18 : vector<16x1xf32> to vector<16x128xf32>
    %20 = arith.subf %16, %19 : vector<16x128xf32>
    %21 = math.exp %20 : vector<16x128xf32>
    %cst_11 = arith.constant dense<0.000000e+00> : vector<16xf32>
    %22 = vector.multi_reduction <add>, %21, %cst_11 [1] : vector<16x128xf32> to vector<16xf32>
    %23 = vector.shape_cast %22 : vector<16xf32> to vector<16x1xf32>
    %24 = tpu.reciprocal %23 {approx = true} : vector<16x1xf32> -> vector<16x1xf32>
    %25 = vector.broadcast %24 : vector<16x1xf32> to vector<16x128xf32>
    %26 = arith.mulf %21, %25 : vector<16x128xf32>
    %c0_12 = arith.constant 0 : index
    %c0_13 = arith.constant 0 : index
    %27 = vector.load %arg4[%c0_12, %c0_13] : memref<16x128xf32, #tpu.memory_space<vmem>>, vector<16x128xf32>
    tpu.vector_store %arg4[%c0_12, %c0_13], %26 {strides = array<i32>} : memref<16x128xf32, #tpu.memory_space<vmem>>, vector<16x128xf32>,
    return
  }
  func.func @transform_0(%arg0: i32) -> (i32, i32) {
    %c0_i32 = arith.constant 0 : i32
    %c0_i32_0 = arith.constant 0 : i32
    return %arg0, %c0_i32 : i32, i32
  }
  func.func @transform_1(%arg0: i32) -> (i32, i32) {
    %c0_i32 = arith.constant 0 : i32
    %c0_i32_0 = arith.constant 0 : i32
    %c0_i32_1 = arith.constant 0 : i32
    return %c0_i32, %c0_i32_0 : i32, i32
  }
  func.func @transform_2(%arg0: i32) -> (i32, i32) {
    %c0_i32 = arith.constant 0 : i32
    %c0_i32_0 = arith.constant 0 : i32
    %c0_i32_1 = arith.constant 0 : i32
    return %c0_i32, %c0_i32_0 : i32, i32
  }
  func.func @transform_3(%arg0: i32) -> (i32, i32) {
    %c0_i32 = arith.constant 0 : i32
    %c0_i32_0 = arith.constant 0 : i32
    return %arg0, %c0_i32 : i32, i32
  }
}

</mosaic_0001>

<llo_original>
// kernel: tpu_custom_call.1
$region0: #{tpu_custom_call.1}
  #allocation0 [shape = 'u32[]', space=smem, size = 0x4, offset = 0x4, fixed_abs, tag = 'smem constant byte address 0x4 - core index']
  #allocation1 [shape = 'u32[144,128]{1,0:T(1,128)}', space=vmem, size = 0x12000, scoped, tag = 'internal scratch']
  %s0 = inlined_call_operand.vmem [shape: f32[16,4], index: 0, kind: input, shape index: {}]
  %s1 = inlined_call_operand.vmem [shape: f32[4,128], index: 1, kind: input, shape index: {}]
  %s2 = inlined_call_operand.hbm [shape: f32[128,128], index: 2, kind: input, shape index: {}]
  %s3 = inlined_call_operand.hbm [shape: f32[16,128], index: 3, kind: output, shape index: {}]
  %s4 = sld [smem:[#allocation0]]
  $region26: #{tpu_custom_call.1} parent=0
    _
  %s6 = ssub.s32 1, %s4
  %s7 = scalar_select 0, %s6, %s4
  $region1: #{tpu_custom_call.1} parent=0
    #allocation2 [shape = 'u8[65536]{0}', space=vmem, size = 0x10000, scoped, tag = 'input window, operand 2, single buffered']
    #allocation3 [shape = 's32[1]{0}', space=sflag, size = 0x4, scoped, tag = 'scoped memory for tpu_custom_call.1']
    #allocation4 [shape = 's32[1]{0}', space=sflag, size = 0x4, scoped, tag = 'scoped memory for tpu_custom_call.1']
    #allocation5 [shape = 'u8[8192]{0}', space=vmem, size = 0x2000, scoped, tag = 'output window, operand 0, single buffered']
    %8 = vsyncpa [#allocation3], 0
    %9 = vsyncpa [#allocation4], 0
    // Predicated region
    $region2: #{tpu_custom_call.1} parent=1 // pred_check
      _
    $region3: #{tpu_custom_call.1} parent=1 // pred_check_branch
      %11 = sbr.rel (0) target = $region5
    $region4: #{tpu_custom_call.1} parent=1 // pred_region
      _
    $region5: #{tpu_custom_call.1} parent=1 // pred_fallthru
      _
    // Predicated region
    $region6: #{tpu_custom_call.1} parent=1 // pred_check
      _
    $region7: #{tpu_custom_call.1} parent=1 // pred_check_branch
      %13 = sbr.rel (0) target = $region9
    $region8: #{tpu_custom_call.1} parent=1 // pred_region
      _
    $region9: #{tpu_custom_call.1} parent=1 // pred_fallthru
      _
    // Predicated region
    $region10: #{tpu_custom_call.1} parent=1 // pred_check
      _
    $region11: #{tpu_custom_call.1} parent=1 // pred_check_branch
      %15 = sbr.rel (0) target = $region13
    $region12: #{tpu_custom_call.1} parent=1 // pred_region
      %s17 = ssub.s32 2048, 2048
      %18 = vsyncadd [#allocation3], %s17
      %s19 = sshll.u32 [#allocation2], 4
      %s20 = int_to_ptr.vmem [resolvable:$true] %s19
      %25 = dma.hbm_to_vmem [thread:$0]  %s2, 2048, %s20, [#allocation3], 128, 128, 8
    $region13: #{tpu_custom_call.1} parent=1 // pred_fallthru
      _
    // Predicated region
    $region14: #{tpu_custom_call.1} parent=1 // pred_check
      _
    $region15: #{tpu_custom_call.1} parent=1 // pred_check_branch
      %27 = sbr.rel (0) target = $region17
    $region16: #{tpu_custom_call.1} parent=1 // pred_region
      %28 = dma.done [#allocation3], 2048
    $region17: #{tpu_custom_call.1} parent=1 // pred_fallthru
      _
    %v29 = vld [vmem:[%s0] sm:$0xff]
    %v30 = vld [vmem:[%s0 + $0x8] sm:$0xff]
    %v31 = vld [vmem:[%s1] sm:$0xf]
    %vm32 = vcmask 31744
    %v34 = vsel %vm32, %v29, 0
    %v37 = vsel %vm32, %v30, 0
    %vm39 = vcmask 1043456
    %v41 = vsel %vm39, %v31, 0
    %43 = vmatprep.subr.mxu0 0.0
    %44 = vmatpush1.msra.mxu0 0.0
    %45 = vmatprep.subr.mxu0 0.0
    %46 = vmatpush1.msra.mxu0 0.0
    %47 = vmatprep.subr.mxu0 0.0
    %48 = vmatpush1.msra.mxu0 0.0
    %49 = vmatprep.subr.mxu0 0.0
    %50 = vmatpush1.msra.mxu0 0.0
    %51 = vmatprep.subr.mxu0 0.0
    %52 = vmatpush1.msra.mxu0 0.0
    %53 = vmatprep.subr.mxu0 0.0
    %54 = vmatpush1.msra.mxu0 0.0
    %55 = vmatprep.subr.mxu0 0.0
    %56 = vmatpush1.msra.mxu0 0.0
    %57 = vmatprep.subr.mxu0 0.0
    %58 = vmatpush1.msra.mxu0 0.0
    %59 = vmatprep.subr.mxu0 0.0
    %60 = vmatpush1.msra.mxu0 0.0
    %61 = vmatprep.subr.mxu0 0.0
    %62 = vmatpush1.msra.mxu0 0.0
    %63 = vmatprep.subr.mxu0 0.0
    %64 = vmatpush1.msra.mxu0 0.0
    %65 = vmatprep.subr.mxu0 0.0
    %66 = vmatpush1.msra.mxu0 0.0
    %67 = vmatprep.subr.mxu0 0.0
    %68 = vmatpush1.msra.mxu0 0.0
    %69 = vmatprep.subr.mxu0 0.0
    %70 = vmatpush1.msra.mxu0 0.0
    %71 = vmatprep.subr.mxu0 0.0
    %72 = vmatpush1.msra.mxu0 0.0
    %73 = vmatprep.subr.mxu0 0.0
    %74 = vmatpush1.msra.mxu0 %v41
    %75 = vmatprep.subr.mxu0 0.0
    %76 = vmatpush2.msra.mxu0 0.0
    %77 = vmatprep.subr.mxu0 0.0
    %78 = vmatpush2.msra.mxu0 0.0
    %79 = vmatprep.subr.mxu0 0.0
    %80 = vmatpush2.msra.mxu0 0.0
    %81 = vmatprep.subr.mxu0 0.0
    %82 = vmatpush2.msra.mxu0 0.0
    %83 = vmatprep.subr.mxu0 0.0
    %84 = vmatpush2.msra.mxu0 0.0
    %85 = vmatprep.subr.mxu0 0.0
    %86 = vmatpush2.msra.mxu0 0.0
    %87 = vmatprep.subr.mxu0 0.0
    %88 = vmatpush2.msra.mxu0 0.0
    %89 = vmatprep.subr.mxu0 0.0
    %90 = vmatpush2.msra.mxu0 0.0
    %91 = vmatprep.subr.mxu0 0.0
    %92 = vmatpush2.msra.mxu0 0.0
    %93 = vmatprep.subr.mxu0 0.0
    %94 = vmatpush2.msra.mxu0 0.0
    %95 = vmatprep.subr.mxu0 0.0
    %96 = vmatpush2.msra.mxu0 0.0
    %97 = vmatprep.subr.mxu0 0.0
    %98 = vmatpush2.msra.mxu0 0.0
    %99 = vmatprep.subr.mxu0 0.0
    %100 = vmatpush2.msra.mxu0 0.0
    %101 = vmatprep.subr.mxu0 0.0
    %102 = vmatpush2.msra.mxu0 0.0
    %103 = vmatprep.subr.mxu0 0.0
    %104 = vmatpush2.msra.mxu0 0.0
    %105 = vmatprep.subr.mxu0 0.0
    %106 = vmatpush2.msra.mxu0 0.0
    %107 = vmatprep.mubr.f32.mxu0 0.0
    %108 = vmatmul.mubr.f32.gmra.mxu0 %v34
    %v109 = vpop.f32.mrf.mxu0
    %v110 = vadd.f32 0.0, %v109
    %v111 = vpop.f32.mrf.mxu0
    %112 = vmatprep.mubr.f32.mxu0 0.0
    %113 = vmatmul.mubr.f32.gmra.mxu0 %v37
    %v114 = vpop.f32.mrf.mxu0
    %v115 = vadd.f32 0.0, %v114
    %v116 = vpop.f32.mrf.mxu0
    %117 = vdwg.mxu0
    %v118 = vmul.f32 %v110, 0.5
    %v119 = vmul.f32 %v115, 0.5
    %v120 = vtanh.pop %v118
    %v121 = vtanh.pop %v119
    %v122 = vadd.f32 %v120, 1.0
    %v123 = vadd.f32 %v121, 1.0
    %v124 = vmul.f32 %v122, 0.5
    %v125 = vmul.f32 %v123, 0.5
    %v126 = vld [vmem:[#allocation2] sm:$0xff]
    %v127 = vld [vmem:[#allocation2 + $0x8] sm:$0xff]
    %v128 = vld [vmem:[#allocation2 + $0x10] sm:$0xff]
    %v129 = vld [vmem:[#allocation2 + $0x18] sm:$0xff]
    %v130 = vld [vmem:[#allocation2 + $0x20] sm:$0xff]
    %v131 = vld [vmem:[#allocation2 + $0x28] sm:$0xff]
    %v132 = vld [vmem:[#allocation2 + $0x30] sm:$0xff]
    %v133 = vld [vmem:[#allocation2 + $0x38] sm:$0xff]
    %v134 = vld [vmem:[#allocation2 + $0x40] sm:$0xff]
    %v135 = vld [vmem:[#allocation2 + $0x48] sm:$0xff]
    %v136 = vld [vmem:[#allocation2 + $0x50] sm:$0xff]
    %v137 = vld [vmem:[#allocation2 + $0x58] sm:$0xff]
    %v138 = vld [vmem:[#allocation2 + $0x60] sm:$0xff]
    %v139 = vld [vmem:[#allocation2 + $0x68] sm:$0xff]
    %v140 = vld [vmem:[#allocation2 + $0x70] sm:$0xff]
    %v141 = vld [vmem:[#allocation2 + $0x78] sm:$0xff]
    %142 = vmatprep.subr.mxu0 0.0
    %143 = vmatpush1.msra.mxu0 %v141
    %144 = vmatprep.subr.mxu0 0.0
    %145 = vmatpush1.msra.mxu0 %v140
    %146 = vmatprep.subr.mxu0 0.0
    %147 = vmatpush1.msra.mxu0 %v139
    %148 = vmatprep.subr.mxu0 0.0
    %149 = vmatpush1.msra.mxu0 %v138
    %150 = vmatprep.subr.mxu0 0.0
    %151 = vmatpush1.msra.mxu0 %v137
    %152 = vmatprep.subr.mxu0 0.0
    %153 = vmatpush1.msra.mxu0 %v136
    %154 = vmatprep.subr.mxu0 0.0
    %155 = vmatpush1.msra.mxu0 %v135
    %156 = vmatprep.subr.mxu0 0.0
    %157 = vmatpush1.msra.mxu0 %v134
    %158 = vmatprep.subr.mxu0 0.0
    %159 = vmatpush1.msra.mxu0 %v133
    %160 = vmatprep.subr.mxu0 0.0
    %161 = vmatpush1.msra.mxu0 %v132
    %162 = vmatprep.subr.mxu0 0.0
    %163 = vmatpush1.msra.mxu0 %v131
    %164 = vmatprep.subr.mxu0 0.0
    %165 = vmatpush1.msra.mxu0 %v130
    %166 = vmatprep.subr.mxu0 0.0
    %167 = vmatpush1.msra.mxu0 %v129
    %168 = vmatprep.subr.mxu0 0.0
    %169 = vmatpush1.msra.mxu0 %v128
    %170 = vmatprep.subr.mxu0 0.0
    %171 = vmatpush1.msra.mxu0 %v127
    %172 = vmatprep.subr.mxu0 0.0
    %173 = vmatpush1.msra.mxu0 %v126
    %174 = vmatprep.subr.mxu0 0.0
    %175 = vmatpush2.msra.mxu0 0.0
    %176 = vmatprep.subr.mxu0 0.0
    %177 = vmatpush2.msra.mxu0 0.0
    %178 = vmatprep.subr.mxu0 0.0
    %179 = vmatpush2.msra.mxu0 0.0
    %180 = vmatprep.subr.mxu0 0.0
    %181 = vmatpush2.msra.mxu0 0.0
    %182 = vmatprep.subr.mxu0 0.0
    %183 = vmatpush2.msra.mxu0 0.0
    %184 = vmatprep.subr.mxu0 0.0
    %185 = vmatpush2.msra.mxu0 0.0
    %186 = vmatprep.subr.mxu0 0.0
    %187 = vmatpush2.msra.mxu0 0.0
    %188 = vmatprep.subr.mxu0 0.0
    %189 = vmatpush2.msra.mxu0 0.0
    %190 = vmatprep.subr.mxu0 0.0
    %191 = vmatpush2.msra.mxu0 0.0
    %192 = vmatprep.subr.mxu0 0.0
    %193 = vmatpush2.msra.mxu0 0.0
    %194 = vmatprep.subr.mxu0 0.0
    %195 = vmatpush2.msra.mxu0 0.0
    %196 = vmatprep.subr.mxu0 0.0
    %197 = vmatpush2.msra.mxu0 0.0
    %198 = vmatprep.subr.mxu0 0.0
    %199 = vmatpush2.msra.mxu0 0.0
    %200 = vmatprep.subr.mxu0 0.0
    %201 = vmatpush2.msra.mxu0 0.0
    %202 = vmatprep.subr.mxu0 0.0
    %203 = vmatpush2.msra.mxu0 0.0
    %204 = vmatprep.subr.mxu0 0.0
    %205 = vmatpush2.msra.mxu0 0.0
    %206 = vmatprep.mubr.f32.mxu0 0.0
    %207 = vmatmul.mubr.f32.gmra.mxu0 %v124
    %v208 = vpop.f32.mrf.mxu0
    %v209 = vadd.f32 0.0, %v208
    %v210 = vpop.f32.mrf.mxu0
    %211 = vmatprep.mubr.f32.mxu0 0.0
    %212 = vmatmul.mubr.f32.gmra.mxu0 %v125
    %v213 = vpop.f32.mrf.mxu0
    %v214 = vadd.f32 0.0, %v213
    %v215 = vpop.f32.mrf.mxu0
    %216 = vdwg.mxu0
    %v217 = vlaneseq
    %v218 = vand.u32 %v217, 127
    %vm219 = vcmp.lt.s32.totalorder %v218, 4
    %v220 = vsel %vm219, %v209, -inf
    %v221 = vsel %vm219, %v214, -inf
    %222 = vmax.xlane.f32.xlu0 %v220
    %v223 = vpop.xlane.xlu0 %222
    %224 = vmax.xlane.f32.xlu0 %v221
    %v225 = vpop.xlane.xlu0 %224
    %v226 = vsub.f32 %v220, %v223
    %v227 = vsub.f32 %v221, %v225
    %v228 = vmul.f32 %v226, 1.442695
    %v229 = vpow.pop %v228
    %v230 = vmul.f32 %v227, 1.442695
    %v231 = vpow.pop %v230
    %232 = vadd.xlane.f32.xlu0 %v229
    %v233 = vpop.xlane.xlu0 %232
    %234 = vadd.xlane.f32.xlu0 %v231
    %v235 = vpop.xlane.xlu0 %234
    %v236 = vrcp.pop %v233
    %v237 = vrcp.pop %v235
    %v238 = vmul.f32 %v229, %v236
    %v239 = vmul.f32 %v231, %v237
    %240 = vst [vmem:[#allocation5] sm:$0xff] %v238
    %241 = vst [vmem:[#allocation5 + $0x8] sm:$0xff] %v239
    // Predicated region
    $region18: #{tpu_custom_call.1} parent=1 // pred_check
      _
    $region19: #{tpu_custom_call.1} parent=1 // pred_check_branch
      %243 = sbr.rel (0) target = $region21
    $region20: #{tpu_custom_call.1} parent=1 // pred_region
      %s245 = ssub.s32 256, 256
      %246 = vsyncadd [#allocation4], %s245
      %s247 = sshll.u32 [#allocation5], 4
      %s248 = int_to_ptr.vmem [resolvable:$true] %s247
      %253 = dma.vmem_to_hbm [thread:$0]  %s248, 256, %s3, [#allocation4], 128, 128, 8
    $region21: #{tpu_custom_call.1} parent=1 // pred_fallthru
      _
    // Predicated region
    $region22: #{tpu_custom_call.1} parent=1 // pred_check
      _
    $region23: #{tpu_custom_call.1} parent=1 // pred_check_branch
      %255 = sbr.rel (0) target = $region25
    $region24: #{tpu_custom_call.1} parent=1 // pred_region
      %256 = dma.done [#allocation4], 256
    $region25: #{tpu_custom_call.1} parent=1 // pred_fallthru
      _
    %257 = vsyncpa [#allocation3], 1
    %258 = vsyncpa [#allocation4], 1

</llo_original>
